<compile_context>
chip_gen: v5e
topology: v5e:2x2
jax: 0.10.0
libtpu: 0.0.40
codegen_flags: <defaults>
</compile_context>

<pallas_src>
import jax
import jax.numpy as jnp
from jax.experimental import pallas as pl
from jax.experimental.pallas import tpu as pltpu


def _add_prompt_kernel(x_ref, prompt_ref, o_ref):
    # x_ref/o_ref: (bb, nb) tile; prompt_ref: (1, nb) — broadcast over rows.
    o_ref[...] = (x_ref[...] + prompt_ref[...]).astype(o_ref.dtype)


def _sublane_tile(itemsize):
    # Native sublane tile: 8 rows for 4-byte, 16 for 2-byte, 32 for 1-byte.
    return max(8, 32 // int(itemsize))


def _choose_tiles(B, N, itemsize_in, itemsize_out, target_block_bytes):
    """Pick (bb, nb): batch rows and lane width per block, never exceeding
    the per-array VMEM budget."""
    itemsize = max(itemsize_in, itemsize_out)
    align = max(_sublane_tile(itemsize_in), _sublane_tile(itemsize_out))
    row_bytes = N * itemsize
    rows_budget = target_block_bytes // row_bytes

    if rows_budget >= align:
        # Whole rows fit in the budget: keep the full lane width.
        nb = N
        if B <= align:
            bb = B                                     # full batch dim (legal block)
        else:
            bb = min((rows_budget // align) * align, (B // align) * align)
            bb = max(bb, align)
            # Keep >= 2 grid steps so both v7x TensorCores get work.
            bb = min(bb, align * max(1, pl.cdiv(B, 2 * align)))
            # Prefer a bb that divides B evenly (no masked final block).
            for cand in range(bb, align - 1, -align):
                if B % cand == 0:
                    bb = cand
                    break
    elif rows_budget >= B:
        # Tiny batch: the whole thing fits in one block.
        bb, nb = B, N
    else:
        # A single aligned row-group exceeds the budget (large H*W): keep
        # bb at the sublane tile and split the lane axis in 128-multiples.
        bb = min(B, align)
        lanes_budget = max(128, target_block_bytes // (bb * itemsize))
        nb = min(N, (lanes_budget // 128) * 128)
        # Prefer an nb that divides N evenly (no masked partial lane block).
        cand = nb
        while cand > 128 and N % cand != 0:
            cand -= 128
        if cand >= 128 and N % cand == 0:
            nb = cand
    return bb, nb


def pad_prompter_forward(x, pad_up, pad_down, pad_left, pad_right,
                         *, target_block_bytes=4 * 1024 * 1024,
                         min_pallas_bytes=1 * 1024 * 1024,
                         donate_x=False):
    """PadPrompter.forward: returns x + prompt (prompt broadcast over batch)."""
    B, C, H, W = x.shape
    ps = pad_up.shape[2]
    base_size = H - 2 * ps
    assert pad_up.shape == (1, C, ps, W)
    assert pad_down.shape == (1, C, ps, W)
    assert pad_left.shape == (1, C, base_size, ps)
    assert pad_right.shape == (1, C, base_size, ps)

    # Assemble the prompt once (matches the PyTorch forward exactly).
    pdtype = jnp.result_type(pad_up.dtype, pad_down.dtype,
                             pad_left.dtype, pad_right.dtype)
    base = jnp.zeros((1, C, base_size, base_size), pdtype)
    mid = jnp.concatenate(
        [pad_left.astype(pdtype), base, pad_right.astype(pdtype)], axis=3)
    prompt = jnp.concatenate(
        [pad_up.astype(pdtype), mid, pad_down.astype(pdtype)], axis=2)

    # Promote-then-add semantics (matches torch's `x + prompt`).
    out_dtype = jnp.result_type(x.dtype, pdtype)
    itemsize_in = jnp.dtype(x.dtype).itemsize
    itemsize_out = jnp.dtype(out_dtype).itemsize

    N = C * H * W
    total_bytes = B * N * (itemsize_in + itemsize_out)
    if total_bytes < min_pallas_bytes:
        # Tiny tensors: custom-call launch overhead dominates; fused XLA add.
        return (x + prompt).astype(out_dtype)

    x2 = x.reshape(B, N)
    prompt2 = prompt.astype(out_dtype).reshape(1, N)

    bb, nb = _choose_tiles(B, N, itemsize_in, itemsize_out, target_block_bytes)
    grid = (pl.cdiv(B, bb), pl.cdiv(N, nb))

    # Explicit VMEM budget: double-buffered x/out tiles + prompt buffers,
    # with headroom.  Capped at 48 MiB so it is safe on v7x (64 MiB physical)
    # and comfortably above v5e's 16 MiB scoped default.
    block_in = bb * nb * itemsize_in
    block_out = bb * nb * itemsize_out
    prompt_block = nb * itemsize_out
    live_est = 2 * (block_in + block_out) + 2 * prompt_block + (1 << 20)
    vmem_limit = int(min(48 * 1024 * 1024, max(32 * 1024 * 1024, 2 * live_est)))

    cost = pl.CostEstimate(
        flops=B * N,
        transcendentals=0,
        bytes_accessed=B * N * (itemsize_in + itemsize_out) + N * itemsize_out,
    )

    alias = {}
    if donate_x and x.dtype == out_dtype:
        alias = {0: 0}   # alias x2 -> out when the caller donates x

    out2 = pl.pallas_call(
        _add_prompt_kernel,
        out_shape=jax.ShapeDtypeStruct((B, N), out_dtype),
        grid=grid,
        in_specs=[
            pl.BlockSpec((bb, nb), lambda i, j: (i, j)),   # streaming x tile
            pl.BlockSpec((1, nb), lambda i, j: (0, j)),    # prompt row, reused
        ],
        out_specs=pl.BlockSpec((bb, nb), lambda i, j: (i, j)),
        compiler_params=pltpu.CompilerParams(
            dimension_semantics=("parallel", "parallel"),
            vmem_limit_bytes=vmem_limit),
        cost_estimate=cost,
        input_output_aliases=alias,
    )(x2, prompt2)

    return out2.reshape(B, C, H, W)


if __name__ == "__main__":
    # Small, module-consistent shapes: image_size=16, prompt_size=4, batch=2.
    image_size = 16
    prompt_size = 4
    base_size = image_size - 2 * prompt_size
    batch = 2

    key = jax.random.PRNGKey(0)
    kx, ku, kd, kl, kr = jax.random.split(key, 5)

    x = jax.random.normal(kx, (batch, 3, image_size, image_size), jnp.float32)
    pad_up = jax.random.normal(ku, (1, 3, prompt_size, image_size), jnp.float32)
    pad_down = jax.random.normal(kd, (1, 3, prompt_size, image_size), jnp.float32)
    pad_left = jax.random.normal(kl, (1, 3, base_size, prompt_size), jnp.float32)
    pad_right = jax.random.normal(kr, (1, 3, base_size, prompt_size), jnp.float32)

    # Force the Pallas path even at this tiny test size.
    out = pad_prompter_forward(x, pad_up, pad_down, pad_left, pad_right,
                               min_pallas_bytes=0)
    out = jax.block_until_ready(out)

    # Pure-JAX reference of the PyTorch forward.
    base = jnp.zeros((1, 3, base_size, base_size), jnp.float32)
    ref_prompt = jnp.concatenate([pad_left, base, pad_right], axis=3)
    ref_prompt = jnp.concatenate([pad_up, ref_prompt, pad_down], axis=2)
    ref = x + ref_prompt  # broadcast over batch == torch.cat(B * [prompt])

    assert out.shape == (batch, 3, image_size, image_size)
    assert jnp.allclose(out, ref, atol=1e-6), "mismatch vs reference (small)"

    # Second check: batch large enough to exercise a multi-step parallel grid
    # (bb=16 rows -> 2 batch blocks) while staying small.
    batch2, img2, ps2 = 32, 32, 8
    bsz2 = img2 - 2 * ps2
    k2 = jax.random.split(jax.random.PRNGKey(0), 5)
    x_b = jax.random.normal(k2[0], (batch2, 3, img2, img2), jnp.float32)
    up_b = jax.random.normal(k2[1], (1, 3, ps2, img2), jnp.float32)
    dn_b = jax.random.normal(k2[2], (1, 3, ps2, img2), jnp.float32)
    lf_b = jax.random.normal(k2[3], (1, 3, bsz2, ps2), jnp.float32)
    rt_b = jax.random.normal(k2[4], (1, 3, bsz2, ps2), jnp.float32)
    out_b = jax.block_until_ready(
        pad_prompter_forward(x_b, up_b, dn_b, lf_b, rt_b, min_pallas_bytes=0))
    base_b = jnp.zeros((1, 3, bsz2, bsz2), jnp.float32)
    ref_pb = jnp.concatenate([lf_b, base_b, rt_b], axis=3)
    ref_pb = jnp.concatenate([up_b, ref_pb, dn_b], axis=2)
    assert jnp.allclose(out_b, x_b + ref_pb, atol=1e-6), "mismatch vs reference (batched)"

    print("KERNEL_OK")
</pallas_src>

<mosaic_0001>
module attributes {stable_mosaic.version = 11 : i64} {
  func.func @_add_prompt_kernel(%arg0: i32, %arg1: i32, %arg2: memref<2x768xf32, #tpu.memory_space<vmem>>, %arg3: memref<1x768xf32, #tpu.memory_space<vmem>>, %arg4: memref<2x768xf32, #tpu.memory_space<vmem>>) attributes {dimension_semantics = [#tpu.dimension_semantics<parallel>, #tpu.dimension_semantics<parallel>], iteration_bounds = array<i64: 1, 1>, scalar_prefetch = 0 : i64, scratch_operands = 0 : i64, tpu.core_type = #tpu.core_type<tc>, window_params = [{transform_indices = @transform_0, window_bounds = array<i64: 2, 768>}, {transform_indices = @transform_1, window_bounds = array<i64: 1, 768>}, {transform_indices = @transform_2, window_bounds = array<i64: 2, 768>}]} {
    %c0 = arith.constant 0 : index
    %c0_0 = arith.constant 0 : index
    %0 = vector.load %arg2[%c0, %c0_0] : memref<2x768xf32, #tpu.memory_space<vmem>>, vector<2x768xf32>
    %c0_1 = arith.constant 0 : index
    %c0_2 = arith.constant 0 : index
    %1 = vector.load %arg3[%c0_1, %c0_2] : memref<1x768xf32, #tpu.memory_space<vmem>>, vector<1x768xf32>
    %2 = vector.broadcast %1 : vector<1x768xf32> to vector<2x768xf32>
    %3 = arith.addf %0, %2 : vector<2x768xf32>
    %c0_3 = arith.constant 0 : index
    %c0_4 = arith.constant 0 : index
    %4 = vector.load %arg4[%c0_3, %c0_4] : memref<2x768xf32, #tpu.memory_space<vmem>>, vector<2x768xf32>
    tpu.vector_store %arg4[%c0_3, %c0_4], %3 {strides = array<i32>} : memref<2x768xf32, #tpu.memory_space<vmem>>, vector<2x768xf32>,
    return
  }
  func.func @transform_0(%arg0: i32, %arg1: i32) -> (i32, i32) {
    %c0_i32 = arith.constant 0 : i32
    return %arg0, %arg1 : i32, i32
  }
  func.func @transform_1(%arg0: i32, %arg1: i32) -> (i32, i32) {
    %c0_i32 = arith.constant 0 : i32
    %c0_i32_0 = arith.constant 0 : i32
    return %c0_i32, %arg1 : i32, i32
  }
  func.func @transform_2(%arg0: i32, %arg1: i32) -> (i32, i32) {
    %c0_i32 = arith.constant 0 : i32
    return %arg0, %arg1 : i32, i32
  }
}

</mosaic_0001>

<llo_original>
// kernel: tpu_custom_call.1
$region0: #{tpu_custom_call.1}
  #allocation0 [shape = 'u32[]', space=smem, size = 0x4, offset = 0x4, fixed_abs, tag = 'smem constant byte address 0x4 - core index']
  #allocation1 [shape = 'u32[72,128]{1,0:T(1,128)}', space=vmem, size = 0x9000, scoped, tag = 'internal scratch']
  %s0 = inlined_call_operand.hbm [shape: f32[2,768], index: 0, kind: input, shape index: {}]
  %s1 = inlined_call_operand.hbm [shape: f32[1,768], index: 1, kind: input, shape index: {}]
  %s2 = inlined_call_operand.hbm [shape: f32[2,768], index: 2, kind: output, shape index: {}]
  %s3 = sld [smem:[#allocation0]]
  $region26: #{tpu_custom_call.1} parent=0
    _
  %s5 = ssub.s32 1, %s3
  %s6 = scalar_select 0, %s5, %s3
  $region1: #{tpu_custom_call.1} parent=0
    #allocation2 [shape = 'u8[6144]{0}', space=vmem, size = 0x1800, scoped, tag = 'input window, operand 0, single buffered']
    #allocation3 [shape = 's32[1]{0}', space=sflag, size = 0x4, scoped, tag = 'scoped memory for tpu_custom_call.1']
    #allocation4 [shape = 's32[1]{0}', space=sflag, size = 0x4, scoped, tag = 'scoped memory for tpu_custom_call.1']
    #allocation5 [shape = 'u8[3072]{0}', space=vmem, size = 0xc00, scoped, tag = 'input window, operand 1, single buffered']
    #allocation6 [shape = 's32[1]{0}', space=sflag, size = 0x4, scoped, tag = 'scoped memory for tpu_custom_call.1']
    #allocation7 [shape = 'u8[6144]{0}', space=vmem, size = 0x1800, scoped, tag = 'output window, operand 0, single buffered']
    %7 = vsyncpa [#allocation3], 0
    %8 = vsyncpa [#allocation6], 0
    %9 = vsyncpa [#allocation4], 0
    // Predicated region
    $region2: #{tpu_custom_call.1} parent=1 // pred_check
      _
    $region3: #{tpu_custom_call.1} parent=1 // pred_check_branch
      %11 = sbr.rel (0) target = $region5
    $region4: #{tpu_custom_call.1} parent=1 // pred_region
      %13 = vsyncadd [#allocation3], 0
      %s15 = sshll.u32 %s0, 4
      %s16 = int_to_ptr.hbm [resolvable:$true] %s15
      %s17 = sshll.u32 [#allocation2], 4
      %s18 = int_to_ptr.vmem [resolvable:$true] %s17
      %20 = dma.hbm_to_vmem [thread:$0]  %s16, 192, %s18, [#allocation3]
    $region5: #{tpu_custom_call.1} parent=1 // pred_fallthru
      _
    // Predicated region
    $region6: #{tpu_custom_call.1} parent=1 // pred_check
      _
    $region7: #{tpu_custom_call.1} parent=1 // pred_check_branch
      %22 = sbr.rel (0) target = $region9
    $region8: #{tpu_custom_call.1} parent=1 // pred_region
      %24 = vsyncadd [#allocation6], 0
      %s26 = sshll.u32 %s1, 4
      %s27 = int_to_ptr.hbm [resolvable:$true] %s26
      %s28 = sshll.u32 [#allocation5], 4
      %s29 = int_to_ptr.vmem [resolvable:$true] %s28
      %31 = dma.hbm_to_vmem [thread:$0]  %s27, 96, %s29, [#allocation6]
    $region9: #{tpu_custom_call.1} parent=1 // pred_fallthru
      _
    // Predicated region
    $region10: #{tpu_custom_call.1} parent=1 // pred_check
      _
    $region11: #{tpu_custom_call.1} parent=1 // pred_check_branch
      %33 = sbr.rel (0) target = $region13
    $region12: #{tpu_custom_call.1} parent=1 // pred_region
      %35 = dma.done [#allocation3], 192
    $region13: #{tpu_custom_call.1} parent=1 // pred_fallthru
      _
    // Predicated region
    $region14: #{tpu_custom_call.1} parent=1 // pred_check
      _
    $region15: #{tpu_custom_call.1} parent=1 // pred_check_branch
      %37 = sbr.rel (0) target = $region17
    $region16: #{tpu_custom_call.1} parent=1 // pred_region
      %39 = dma.done [#allocation6], 96
    $region17: #{tpu_custom_call.1} parent=1 // pred_fallthru
      _
    %v40 = vld [vmem:[#allocation2] sm:$0xff]
    %v41 = vld [vmem:[#allocation2 + $0x8] sm:$0xf]
    %v42 = vld [vmem:[#allocation5] sm:$0x3f]
    %v44 = vperm.slane %v42, 0
    %v45 = vperm.slane %v42, 1
    %v46 = vperm.slane %v42, 2
    %v47 = vperm.slane %v42, 3
    %v48 = vperm.slane %v42, 4
    %v49 = vperm.slane %v42, 5
    %v50 = vrot.slane %v45, 6
    %v51 = vrot.slane %v46, 4
    %v52 = vrot.slane %v47, 2
    %v53 = vrot.slane %v49, 6
    %vm54 = vcmask 1041408
    %v55 = vsel %vm54, %v44, %v50
    %vm56 = vcmask 1045508
    %v57 = vsel %vm56, %v51, %v52
    %vm58 = vcmask 1043456
    %v59 = vsel %vm58, %v55, %v57
    %v60 = vsel %vm54, %v48, %v53
    %v63 = vadd.f32 %v40, %v59
    %v64 = vadd.f32 %v41, %v60
    %65 = vst [vmem:[#allocation7] sm:$0xff] %v63
    %66 = vst [vmem:[#allocation7 + $0x8] sm:$0xf] %v64
    // Predicated region
    $region18: #{tpu_custom_call.1} parent=1 // pred_check
      _
    $region19: #{tpu_custom_call.1} parent=1 // pred_check_branch
      %68 = sbr.rel (0) target = $region21
    $region20: #{tpu_custom_call.1} parent=1 // pred_region
      %70 = vsyncadd [#allocation4], 0
      %s72 = sshll.u32 [#allocation7], 4
      %s73 = int_to_ptr.vmem [resolvable:$true] %s72
      %s74 = sshll.u32 %s2, 4
      %s75 = int_to_ptr.hbm [resolvable:$true] %s74
      %77 = dma.vmem_to_hbm [thread:$0]  %s73, 192, %s75, [#allocation4]
    $region21: #{tpu_custom_call.1} parent=1 // pred_fallthru
      _
    // Predicated region
    $region22: #{tpu_custom_call.1} parent=1 // pred_check
      _
    $region23: #{tpu_custom_call.1} parent=1 // pred_check_branch
      %79 = sbr.rel (0) target = $region25
    $region24: #{tpu_custom_call.1} parent=1 // pred_region
      %81 = dma.done [#allocation4], 192
    $region25: #{tpu_custom_call.1} parent=1 // pred_fallthru
      _
    %82 = vsyncpa [#allocation3], 1
    %83 = vsyncpa [#allocation6], 1
    %84 = vsyncpa [#allocation4], 1

</llo_original>
